<compile_context>
chip_gen: v7x
topology: tpu7x:2x2x1
jax: 0.10.0
libtpu: 0.0.40
codegen_flags: <defaults>
</compile_context>

<pallas_src>
import functools
import math

import jax
import jax.numpy as jnp
from jax.experimental import pallas as pl
from jax.experimental.pallas import tpu as pltpu

_LANE = 128
_SUB = 8


def _write_partials(num_ref, den_ref, num_s, den_s):
    """Write scalar partials into element [0, 0] of the (8, 128) output blocks."""
    r = jax.lax.broadcasted_iota(jnp.int32, num_ref.shape, 0)
    c = jax.lax.broadcasted_iota(jnp.int32, num_ref.shape, 1)
    first = jnp.logical_and(r == 0, c == 0)
    num_ref[...] = jnp.where(first, num_s, 0.0)
    den_ref[...] = jnp.where(first, den_s, 0.0)


def _nll_spatial_kernel(w_ref, p_ref, l_ref, num_ref, den_ref, *,
                        n_classes, weighted, srows, block_rows):
    """Spatial / small-C kernel.

    w_ref:   (C, 128)             f32   per-class weight, lane-broadcast
    p_ref:   (1, C, rows, 128)    any   log-prob tile (dense (rows,128) per class)
    l_ref:   (1, rows, 128)       int   labels tile
    num/den: (8, 128)             f32   per-step partial sums (element [0,0])
    """
    j = pl.program_id(1)

    lbl = l_ref[0].astype(jnp.int32)                       # (rows, 128)
    # Mask the ragged sublane tail of the last block (trace-time decision).
    if srows % block_rows != 0:
        row = (jax.lax.broadcasted_iota(jnp.int32, (block_rows, 1), 0)
               + j * block_rows)
        lbl = jnp.where(row < srows, lbl, -1)

    if weighted:
        wmat = w_ref[...].astype(jnp.float32)              # (C, 128)

    num_s = jnp.float32(0.0)
    den_s = jnp.float32(0.0)
    for c in range(n_classes):                              # unrolled: small C
        sel = lbl == c                                      # (rows, 128)
        p_c = p_ref[0, c].astype(jnp.float32)               # (rows, 128)
        p_sel = jnp.where(sel, p_c, 0.0)                    # garbage never escapes
        if weighted:
            w_c = wmat[c:c + 1]                             # (1, 128), all == w[c]
            num_s = num_s + jnp.sum(p_sel * w_c)
            den_s = den_s + jnp.sum(jnp.where(sel, w_c, 0.0))
        else:
            num_s = num_s + jnp.sum(p_sel)

    if not weighted:
        valid = jnp.logical_and(lbl >= 0, lbl < n_classes)
        den_s = jnp.sum(valid.astype(jnp.float32))

    _write_partials(num_ref, den_ref, num_s, den_s)


def _nll_rowwise_kernel(w_ref, p_ref, l_ref, num_ref, den_ref, *,
                        n_classes, weighted, n_rows, block_rows):
    """(M, C) classification kernel with the class axis on lanes (C >= 128).

    w_ref:   (1, C)     f32
    p_ref:   (tm, C)    any
    l_ref:   (tm, 1)    int
    num/den: (8, 128)   f32 per-step partials
    """
    i = pl.program_id(0)

    p = p_ref[...].astype(jnp.float32)                      # (tm, C)
    lbl = l_ref[...].astype(jnp.int32)                      # (tm, 1)
    if n_rows % block_rows != 0:
        row = jax.lax.broadcasted_iota(jnp.int32, lbl.shape, 0) + i * block_rows
        lbl = jnp.where(row < n_rows, lbl, -1)

    cls = jax.lax.broadcasted_iota(jnp.int32, p.shape, 1)   # lane iota
    sel = cls == lbl                                        # (tm, C) one-hot

    if weighted:
        wb = w_ref[...].astype(jnp.float32)                 # (1, C)
        num_s = jnp.sum(jnp.where(sel, p * wb, 0.0))
        den_s = jnp.sum(jnp.where(sel, wb, 0.0))
    else:
        num_s = jnp.sum(jnp.where(sel, p, 0.0))
        valid = jnp.logical_and(lbl >= 0, lbl < n_classes)
        den_s = jnp.sum(valid.astype(jnp.float32))

    _write_partials(num_ref, den_ref, num_s, den_s)


def _vmem_limit(footprint_bytes):
    return int(min(max(2 * footprint_bytes + (8 << 20), 32 << 20), 48 << 20))


def _nll_spatial(p3, l2, w, weighted, target_bytes):
    """Spatial path: p3 (B, C, S) log-probs, l2 (B, S) labels, w (C,) weights."""
    B, C, S = p3.shape
    pad = (-S) % _LANE
    if pad:
        # TODO(synk): host-side pad copy; only when S is not a multiple of 128.
        p3 = jnp.pad(p3, ((0, 0), (0, 0), (0, pad)))
        l2 = jnp.pad(l2, ((0, 0), (0, pad)), constant_values=-1)
    srows = (S + pad) // _LANE

    itemsize = p3.dtype.itemsize
    k = max(1, target_bytes // (C * _LANE * itemsize))
    k = max(_SUB, (k // _SUB) * _SUB)
    if k >= srows:
        k = srows                                   # full extent: always legal
    n_s = pl.cdiv(srows, k)

    p4 = p3.reshape(B, C, srows, _LANE)             # free reshape
    l3 = l2.reshape(B, srows, _LANE)
    w_rows = jnp.broadcast_to(w.reshape(C, 1), (C, _LANE)).astype(jnp.float32)

    kernel = functools.partial(_nll_spatial_kernel, n_classes=C,
                               weighted=weighted, srows=srows, block_rows=k)

    pred_block = C * k * _LANE * itemsize
    lbl_block = k * _LANE * 4
    footprint = 2 * (pred_block + lbl_block) + 2 * C * _LANE * 4 + 4 * _SUB * _LANE * 4

    out_shape = (jax.ShapeDtypeStruct((B * _SUB, n_s * _LANE), jnp.float32),
                 jax.ShapeDtypeStruct((B * _SUB, n_s * _LANE), jnp.float32))

    num_p, den_p = pl.pallas_call(
        kernel,
        out_shape=out_shape,
        grid_spec=pltpu.PrefetchScalarGridSpec(
            num_scalar_prefetch=0,
            grid=(B, n_s),
            in_specs=[
                pl.BlockSpec((C, _LANE), lambda b, j: (0, 0)),            # weights
                pl.BlockSpec((1, C, k, _LANE), lambda b, j: (b, 0, j, 0)),  # log-probs
                pl.BlockSpec((1, k, _LANE), lambda b, j: (b, j, 0)),        # labels
            ],
            out_specs=(
                pl.BlockSpec((_SUB, _LANE), lambda b, j: (b, j)),
                pl.BlockSpec((_SUB, _LANE), lambda b, j: (b, j)),
            ),
        ),
        compiler_params=pltpu.CompilerParams(
            dimension_semantics=("parallel", "parallel"),
            vmem_limit_bytes=_vmem_limit(footprint)),
        cost_estimate=pl.CostEstimate(
            flops=int(6 * C * B * srows * _LANE),
            transcendentals=0,
            bytes_accessed=int(p4.size) * itemsize + int(l3.size) * 4),
    )(w_rows, p4, l3)

    return -(jnp.sum(num_p) / jnp.sum(den_p))


def _nll_rowwise(pred, label, w, weighted, target_bytes):
    """(M, C) classification path with class axis on lanes (no host transpose)."""
    M, C = pred.shape
    itemsize = pred.dtype.itemsize
    tm = max(1, target_bytes // max(1, C * itemsize))
    tm = max(_SUB, (tm // _SUB) * _SUB)
    if tm >= M:
        tm = M                                      # full extent: always legal
    n_m = pl.cdiv(M, tm)

    l2 = label.reshape(M, 1)
    w2 = w.reshape(1, C).astype(jnp.float32)

    kernel = functools.partial(_nll_rowwise_kernel, n_classes=C,
                               weighted=weighted, n_rows=M, block_rows=tm)

    footprint = 2 * (tm * C * itemsize + tm * 4 + C * 4) + 4 * _SUB * _LANE * 4

    num_p, den_p = pl.pallas_call(
        kernel,
        out_shape=(jax.ShapeDtypeStruct((n_m * _SUB, _LANE), jnp.float32),
                   jax.ShapeDtypeStruct((n_m * _SUB, _LANE), jnp.float32)),
        grid_spec=pltpu.PrefetchScalarGridSpec(
            num_scalar_prefetch=0,
            grid=(n_m,),
            in_specs=[
                pl.BlockSpec((1, C), lambda i: (0, 0)),      # weights
                pl.BlockSpec((tm, C), lambda i: (i, 0)),     # log-probs
                pl.BlockSpec((tm, 1), lambda i: (i, 0)),     # labels
            ],
            out_specs=(
                pl.BlockSpec((_SUB, _LANE), lambda i: (i, 0)),
                pl.BlockSpec((_SUB, _LANE), lambda i: (i, 0)),
            ),
        ),
        compiler_params=pltpu.CompilerParams(
            dimension_semantics=("parallel",),
            vmem_limit_bytes=_vmem_limit(footprint)),
        cost_estimate=pl.CostEstimate(
            flops=int(5 * M * C),
            transcendentals=0,
            bytes_accessed=int(pred.size) * itemsize + M * 4),
    )(w2, pred, l2)

    return -(jnp.sum(num_p) / jnp.sum(den_p))


def nll_loss(pred, label, weight=None, *, target_block_bytes=4 * 1024 * 1024):
    """Pallas TPU equivalent of torch.nn.NLLLoss(weight)(pred, label), mean reduction.

    pred:  (M, C) or (N, C, *spatial) log-probabilities (class axis = dim 1).
    label: (M,)   or (N, *spatial)    integer class indices.
    weight: optional (C,) per-class weights.
    """
    pred = jnp.asarray(pred)
    label = jnp.asarray(label).astype(jnp.int32)
    assert pred.ndim >= 2, "pred must be (M, C) or (N, C, *spatial)"
    C = pred.shape[1]

    weighted = weight is not None
    if weighted:
        w = jnp.asarray(weight, jnp.float32).reshape(C)
    else:
        w = jnp.ones((C,), jnp.float32)

    if pred.ndim == 2:
        assert label.shape == (pred.shape[0],)
        if C >= _LANE:
            # Large C: native row-wise kernel, class on lanes — no transpose pass.
            return _nll_rowwise(pred, label, w, weighted, target_block_bytes)
        # Tiny C: lane occupancy of a (tm, C) block would collapse; transpose so
        # samples go on the dense (sublane, lane) spatial axes instead.
        p3 = pred.T[None]                    # (1, C, M)
        l2 = label[None]                     # (1, M)
    else:
        assert label.shape == (pred.shape[0],) + pred.shape[2:]
        B = pred.shape[0]
        S = math.prod(pred.shape[2:])
        p3 = pred.reshape(B, C, S)           # free reshape
        l2 = label.reshape(B, S)

    return _nll_spatial(p3, l2, w, weighted, target_block_bytes)


class NLLLoss:
    """Mirror of the PyTorch module: optional weight = 1 / class_frequencies."""

    def __init__(self, class_frequencies=None):
        if class_frequencies:
            self.weight = 1.0 / jnp.asarray(class_frequencies, jnp.float32)
        else:
            self.weight = None

    def forward(self, pred, label):
        return nll_loss(pred, label, weight=self.weight)

    __call__ = forward


def _reference_nll(pred, label, weight=None):
    """Pure-JAX reference matching torch.nn.NLLLoss (mean reduction)."""
    pred = pred.astype(jnp.float32)
    C = pred.shape[1]
    pred2 = jnp.moveaxis(pred, 1, -1).reshape(-1, C)
    lbl = label.reshape(-1)
    picked = jnp.take_along_axis(pred2, lbl[:, None], axis=1)[:, 0]
    if weight is None:
        w_lbl = jnp.ones_like(picked)
    else:
        w_lbl = jnp.asarray(weight, jnp.float32)[lbl]
    return -(jnp.sum(w_lbl * picked) / jnp.sum(w_lbl))


if __name__ == "__main__":
    key = jax.random.PRNGKey(0)
    k1, k2, k3, k4, k5, k6, k7 = jax.random.split(key, 7)

    # 1) Segmentation-style: (N, C, H, W) log-probs + (N, H, W) labels, with
    #    class-frequency weights (the module's weighted branch).
    N, C, H, W = 2, 4, 16, 16
    logits = jax.random.normal(k1, (N, C, H, W), dtype=jnp.float32)
    log_probs = jax.nn.log_softmax(logits, axis=1)
    label = jax.random.randint(k2, (N, H, W), 0, C, dtype=jnp.int32)
    class_frequencies = [0.4, 0.3, 0.2, 0.1]

    loss_mod = NLLLoss(class_frequencies)
    loss = jax.block_until_ready(loss_mod(log_probs, label))
    ref = _reference_nll(log_probs, label,
                         1.0 / jnp.asarray(class_frequencies, jnp.float32))
    assert jnp.allclose(loss, ref, rtol=1e-5, atol=1e-6), (loss, ref)

    # 2) Plain classification, small class count (transposed small-C path),
    #    no weights.
    M, C2 = 64, 8
    logits2 = jax.random.normal(k3, (M, C2), dtype=jnp.float32)
    log_probs2 = jax.nn.log_softmax(logits2, axis=-1)
    label2 = jax.random.randint(k4, (M,), 0, C2, dtype=jnp.int32)

    loss2 = jax.block_until_ready(NLLLoss()(log_probs2, label2))
    ref2 = _reference_nll(log_probs2, label2, None)
    assert jnp.allclose(loss2, ref2, rtol=1e-5, atol=1e-6), (loss2, ref2)

    # 3) Classification with large class count (row-wise lane-dense path),
    #    weighted.
    M3, C3 = 64, 256
    logits3 = jax.random.normal(k5, (M3, C3), dtype=jnp.float32)
    log_probs3 = jax.nn.log_softmax(logits3, axis=-1)
    label3 = jax.random.randint(k6, (M3,), 0, C3, dtype=jnp.int32)
    w3 = jax.random.uniform(k7, (C3,), minval=0.5, maxval=2.0, dtype=jnp.float32)

    loss3 = jax.block_until_ready(nll_loss(log_probs3, label3, weight=w3))
    ref3 = _reference_nll(log_probs3, label3, w3)
    assert jnp.allclose(loss3, ref3, rtol=1e-5, atol=1e-6), (loss3, ref3)

    print("KERNEL_OK")
</pallas_src>

<mosaic_0001>
module attributes {stable_mosaic.version = 11 : i64} {
  func.func @_nll_spatial_kernel(%arg0: i32, %arg1: i32, %arg2: memref<4x128xf32, #tpu.memory_space<vmem>>, %arg3: memref<1x4x2x128xf32, #tpu.memory_space<vmem>>, %arg4: memref<1x2x128xi32, #tpu.memory_space<vmem>>, %arg5: memref<8x128xf32, #tpu.memory_space<vmem>>, %arg6: memref<8x128xf32, #tpu.memory_space<vmem>>) attributes {dimension_semantics = [#tpu.dimension_semantics<parallel>, #tpu.dimension_semantics<parallel>], iteration_bounds = array<i64: 2, 1>, scalar_prefetch = 0 : i64, scratch_operands = 0 : i64, tpu.core_type = #tpu.core_type<tc>, window_params = [{pipeline_mode = #tpu.pipeline_mode<synchronous>, transform_indices = @transform_0, window_bounds = array<i64: 4, 128>}, {transform_indices = @transform_1, window_bounds = array<i64: 1, 4, 2, 128>}, {transform_indices = @transform_2, window_bounds = array<i64: 1, 2, 128>}, {transform_indices = @transform_3, window_bounds = array<i64: 8, 128>}, {transform_indices = @transform_4, window_bounds = array<i64: 8, 128>}]} {
    %c0 = arith.constant 0 : index
    %c0_0 = arith.constant 0 : index
    %c0_1 = arith.constant 0 : index
    %0 = vector.load %arg4[%c0, %c0_0, %c0_1] : memref<1x2x128xi32, #tpu.memory_space<vmem>>, vector<1x2x128xi32>
    %1 = vector.shape_cast %0 : vector<1x2x128xi32> to vector<2x128xi32>
    %c0_2 = arith.constant 0 : index
    %c0_3 = arith.constant 0 : index
    %2 = vector.load %arg2[%c0_2, %c0_3] : memref<4x128xf32, #tpu.memory_space<vmem>>, vector<4x128xf32>
    %c0_i32 = arith.constant 0 : i32
    %3 = vector.broadcast %c0_i32 : i32 to vector<2x128xi32>
    %4 = arith.cmpi eq, %1, %3 : vector<2x128xi32>
    %c0_4 = arith.constant 0 : index
    %c0_5 = arith.constant 0 : index
    %c0_6 = arith.constant 0 : index
    %c0_7 = arith.constant 0 : index
    %5 = vector.load %arg3[%c0_4, %c0_5, %c0_6, %c0_7] : memref<1x4x2x128xf32, #tpu.memory_space<vmem>>, vector<1x1x2x128xf32>
    %6 = vector.shape_cast %5 : vector<1x1x2x128xf32> to vector<2x128xf32>
    %cst = arith.constant 0.000000e+00 : f32
    %7 = vector.broadcast %cst : f32 to vector<2x128xf32>
    %8 = arith.select %4, %6, %7 : vector<2x128xi1>, vector<2x128xf32>
    %9 = vector.extract_strided_slice %2 {offsets = [0, 0], sizes = [1, 128], strides = [1, 1]} : vector<4x128xf32> to vector<1x128xf32>
    %10 = vector.broadcast %9 : vector<1x128xf32> to vector<2x128xf32>
    %11 = arith.mulf %8, %10 : vector<2x128xf32>
    %12 = vector.shape_cast %11 : vector<2x128xf32> to vector<1x2x128xf32>
    %cst_8 = arith.constant dense<0.000000e+00> : vector<1xf32>
    %13 = vector.multi_reduction <add>, %12, %cst_8 [1, 2] : vector<1x2x128xf32> to vector<1xf32>
    %14 = vector.shape_cast %13 : vector<1xf32> to vector<1x1x1xf32>
    %15 = vector.extract %14[0, 0, 0] : f32 from vector<1x1x1xf32>
    %cst_9 = arith.constant 0.000000e+00 : f32
    %16 = arith.addf %cst_9, %15 : f32
    %cst_10 = arith.constant 0.000000e+00 : f32
    %17 = vector.shape_cast %9 : vector<1x128xf32> to vector<1x128xf32>
    %18 = vector.broadcast %17 : vector<1x128xf32> to vector<2x128xf32>
    %19 = vector.broadcast %cst_10 : f32 to vector<2x128xf32>
    %20 = arith.select %4, %18, %19 : vector<2x128xi1>, vector<2x128xf32>
    %21 = vector.shape_cast %20 : vector<2x128xf32> to vector<1x2x128xf32>
    %cst_11 = arith.constant dense<0.000000e+00> : vector<1xf32>
    %22 = vector.multi_reduction <add>, %21, %cst_11 [1, 2] : vector<1x2x128xf32> to vector<1xf32>
    %23 = vector.shape_cast %22 : vector<1xf32> to vector<1x1x1xf32>
    %24 = vector.extract %23[0, 0, 0] : f32 from vector<1x1x1xf32>
    %cst_12 = arith.constant 0.000000e+00 : f32
    %25 = arith.addf %cst_12, %24 : f32
    %c1_i32 = arith.constant 1 : i32
    %26 = vector.broadcast %c1_i32 : i32 to vector<2x128xi32>
    %27 = arith.cmpi eq, %1, %26 : vector<2x128xi32>
    %c0_13 = arith.constant 0 : index
    %c1 = arith.constant 1 : index
    %c0_14 = arith.constant 0 : index
    %c0_15 = arith.constant 0 : index
    %28 = vector.load %arg3[%c0_13, %c1, %c0_14, %c0_15] : memref<1x4x2x128xf32, #tpu.memory_space<vmem>>, vector<1x1x2x128xf32>
    %29 = vector.shape_cast %28 : vector<1x1x2x128xf32> to vector<2x128xf32>
    %cst_16 = arith.constant 0.000000e+00 : f32
    %30 = vector.broadcast %cst_16 : f32 to vector<2x128xf32>
    %31 = arith.select %27, %29, %30 : vector<2x128xi1>, vector<2x128xf32>
    %32 = vector.extract_strided_slice %2 {offsets = [1, 0], sizes = [1, 128], strides = [1, 1]} : vector<4x128xf32> to vector<1x128xf32>
    %33 = vector.broadcast %32 : vector<1x128xf32> to vector<2x128xf32>
    %34 = arith.mulf %31, %33 : vector<2x128xf32>
    %35 = vector.shape_cast %34 : vector<2x128xf32> to vector<1x2x128xf32>
    %cst_17 = arith.constant dense<0.000000e+00> : vector<1xf32>
    %36 = vector.multi_reduction <add>, %35, %cst_17 [1, 2] : vector<1x2x128xf32> to vector<1xf32>
    %37 = vector.shape_cast %36 : vector<1xf32> to vector<1x1x1xf32>
    %38 = vector.extract %37[0, 0, 0] : f32 from vector<1x1x1xf32>
    %39 = arith.addf %16, %38 : f32
    %cst_18 = arith.constant 0.000000e+00 : f32
    %40 = vector.shape_cast %32 : vector<1x128xf32> to vector<1x128xf32>
    %41 = vector.broadcast %40 : vector<1x128xf32> to vector<2x128xf32>
    %42 = vector.broadcast %cst_18 : f32 to vector<2x128xf32>
    %43 = arith.select %27, %41, %42 : vector<2x128xi1>, vector<2x128xf32>
    %44 = vector.shape_cast %43 : vector<2x128xf32> to vector<1x2x128xf32>
    %cst_19 = arith.constant dense<0.000000e+00> : vector<1xf32>
    %45 = vector.multi_reduction <add>, %44, %cst_19 [1, 2] : vector<1x2x128xf32> to vector<1xf32>
    %46 = vector.shape_cast %45 : vector<1xf32> to vector<1x1x1xf32>
    %47 = vector.extract %46[0, 0, 0] : f32 from vector<1x1x1xf32>
    %48 = arith.addf %25, %47 : f32
    %c2_i32 = arith.constant 2 : i32
    %49 = vector.broadcast %c2_i32 : i32 to vector<2x128xi32>
    %50 = arith.cmpi eq, %1, %49 : vector<2x128xi32>
    %c0_20 = arith.constant 0 : index
    %c2 = arith.constant 2 : index
    %c0_21 = arith.constant 0 : index
    %c0_22 = arith.constant 0 : index
    %51 = vector.load %arg3[%c0_20, %c2, %c0_21, %c0_22] : memref<1x4x2x128xf32, #tpu.memory_space<vmem>>, vector<1x1x2x128xf32>
    %52 = vector.shape_cast %51 : vector<1x1x2x128xf32> to vector<2x128xf32>
    %cst_23 = arith.constant 0.000000e+00 : f32
    %53 = vector.broadcast %cst_23 : f32 to vector<2x128xf32>
    %54 = arith.select %50, %52, %53 : vector<2x128xi1>, vector<2x128xf32>
    %55 = vector.extract_strided_slice %2 {offsets = [2, 0], sizes = [1, 128], strides = [1, 1]} : vector<4x128xf32> to vector<1x128xf32>
    %56 = vector.broadcast %55 : vector<1x128xf32> to vector<2x128xf32>
    %57 = arith.mulf %54, %56 : vector<2x128xf32>
    %58 = vector.shape_cast %57 : vector<2x128xf32> to vector<1x2x128xf32>
    %cst_24 = arith.constant dense<0.000000e+00> : vector<1xf32>
    %59 = vector.multi_reduction <add>, %58, %cst_24 [1, 2] : vector<1x2x128xf32> to vector<1xf32>
    %60 = vector.shape_cast %59 : vector<1xf32> to vector<1x1x1xf32>
    %61 = vector.extract %60[0, 0, 0] : f32 from vector<1x1x1xf32>
    %62 = arith.addf %39, %61 : f32
    %cst_25 = arith.constant 0.000000e+00 : f32
    %63 = vector.shape_cast %55 : vector<1x128xf32> to vector<1x128xf32>
    %64 = vector.broadcast %63 : vector<1x128xf32> to vector<2x128xf32>
    %65 = vector.broadcast %cst_25 : f32 to vector<2x128xf32>
    %66 = arith.select %50, %64, %65 : vector<2x128xi1>, vector<2x128xf32>
    %67 = vector.shape_cast %66 : vector<2x128xf32> to vector<1x2x128xf32>
    %cst_26 = arith.constant dense<0.000000e+00> : vector<1xf32>
    %68 = vector.multi_reduction <add>, %67, %cst_26 [1, 2] : vector<1x2x128xf32> to vector<1xf32>
    %69 = vector.shape_cast %68 : vector<1xf32> to vector<1x1x1xf32>
    %70 = vector.extract %69[0, 0, 0] : f32 from vector<1x1x1xf32>
    %71 = arith.addf %48, %70 : f32
    %c3_i32 = arith.constant 3 : i32
    %72 = vector.broadcast %c3_i32 : i32 to vector<2x128xi32>
    %73 = arith.cmpi eq, %1, %72 : vector<2x128xi32>
    %c0_27 = arith.constant 0 : index
    %c3 = arith.constant 3 : index
    %c0_28 = arith.constant 0 : index
    %c0_29 = arith.constant 0 : index
    %74 = vector.load %arg3[%c0_27, %c3, %c0_28, %c0_29] : memref<1x4x2x128xf32, #tpu.memory_space<vmem>>, vector<1x1x2x128xf32>
    %75 = vector.shape_cast %74 : vector<1x1x2x128xf32> to vector<2x128xf32>
    %cst_30 = arith.constant 0.000000e+00 : f32
    %76 = vector.broadcast %cst_30 : f32 to vector<2x128xf32>
    %77 = arith.select %73, %75, %76 : vector<2x128xi1>, vector<2x128xf32>
    %78 = vector.extract_strided_slice %2 {offsets = [3, 0], sizes = [1, 128], strides = [1, 1]} : vector<4x128xf32> to vector<1x128xf32>
    %79 = vector.broadcast %78 : vector<1x128xf32> to vector<2x128xf32>
    %80 = arith.mulf %77, %79 : vector<2x128xf32>
    %81 = vector.shape_cast %80 : vector<2x128xf32> to vector<1x2x128xf32>
    %cst_31 = arith.constant dense<0.000000e+00> : vector<1xf32>
    %82 = vector.multi_reduction <add>, %81, %cst_31 [1, 2] : vector<1x2x128xf32> to vector<1xf32>
    %83 = vector.shape_cast %82 : vector<1xf32> to vector<1x1x1xf32>
    %84 = vector.extract %83[0, 0, 0] : f32 from vector<1x1x1xf32>
    %85 = arith.addf %62, %84 : f32
    %cst_32 = arith.constant 0.000000e+00 : f32
    %86 = vector.shape_cast %78 : vector<1x128xf32> to vector<1x128xf32>
    %87 = vector.broadcast %86 : vector<1x128xf32> to vector<2x128xf32>
    %88 = vector.broadcast %cst_32 : f32 to vector<2x128xf32>
    %89 = arith.select %73, %87, %88 : vector<2x128xi1>, vector<2x128xf32>
    %90 = vector.shape_cast %89 : vector<2x128xf32> to vector<1x2x128xf32>
    %cst_33 = arith.constant dense<0.000000e+00> : vector<1xf32>
    %91 = vector.multi_reduction <add>, %90, %cst_33 [1, 2] : vector<1x2x128xf32> to vector<1xf32>
    %92 = vector.shape_cast %91 : vector<1xf32> to vector<1x1x1xf32>
    %93 = vector.extract %92[0, 0, 0] : f32 from vector<1x1x1xf32>
    %94 = arith.addf %71, %93 : f32
    %95 = tpu.iota {dimensions = array<i32: 0>} : vector<8x128xi32>
    %96 = tpu.iota {dimensions = array<i32: 1>} : vector<8x128xi32>
    %c0_i32_34 = arith.constant 0 : i32
    %97 = vector.broadcast %c0_i32_34 : i32 to vector<8x128xi32>
    %98 = arith.cmpi eq, %95, %97 : vector<8x128xi32>
    %c0_i32_35 = arith.constant 0 : i32
    %99 = vector.broadcast %c0_i32_35 : i32 to vector<8x128xi32>
    %100 = arith.cmpi eq, %96, %99 : vector<8x128xi32>
    %101 = arith.andi %98, %100 : vector<8x128xi1>
    %cst_36 = arith.constant 0.000000e+00 : f32
    %102 = vector.broadcast %85 : f32 to vector<8x128xf32>
    %103 = vector.broadcast %cst_36 : f32 to vector<8x128xf32>
    %104 = arith.select %101, %102, %103 : vector<8x128xi1>, vector<8x128xf32>
    %c0_37 = arith.constant 0 : index
    %c0_38 = arith.constant 0 : index
    %105 = vector.load %arg5[%c0_37, %c0_38] : memref<8x128xf32, #tpu.memory_space<vmem>>, vector<8x128xf32>
    tpu.vector_store %arg5[%c0_37, %c0_38], %104 {strides = array<i32>} : memref<8x128xf32, #tpu.memory_space<vmem>>, vector<8x128xf32>,
    %cst_39 = arith.constant 0.000000e+00 : f32
    %106 = vector.broadcast %94 : f32 to vector<8x128xf32>
    %107 = vector.broadcast %cst_39 : f32 to vector<8x128xf32>
    %108 = arith.select %101, %106, %107 : vector<8x128xi1>, vector<8x128xf32>
    %c0_40 = arith.constant 0 : index
    %c0_41 = arith.constant 0 : index
    %109 = vector.load %arg6[%c0_40, %c0_41] : memref<8x128xf32, #tpu.memory_space<vmem>>, vector<8x128xf32>
    tpu.vector_store %arg6[%c0_40, %c0_41], %108 {strides = array<i32>} : memref<8x128xf32, #tpu.memory_space<vmem>>, vector<8x128xf32>,
    return
  }
  func.func @transform_0(%arg0: i32, %arg1: i32) -> (i32, i32) {
    %c0_i32 = arith.constant 0 : i32
    %c0_i32_0 = arith.constant 0 : i32
    %c0_i32_1 = arith.constant 0 : i32
    return %c0_i32, %c0_i32_0 : i32, i32
  }
  func.func @transform_1(%arg0: i32, %arg1: i32) -> (i32, i32, i32, i32) {
    %c0_i32 = arith.constant 0 : i32
    %c0_i32_0 = arith.constant 0 : i32
    %c0_i32_1 = arith.constant 0 : i32
    return %arg0, %c0_i32, %arg1, %c0_i32_0 : i32, i32, i32, i32
  }
  func.func @transform_2(%arg0: i32, %arg1: i32) -> (i32, i32, i32) {
    %c0_i32 = arith.constant 0 : i32
    %c0_i32_0 = arith.constant 0 : i32
    return %arg0, %arg1, %c0_i32 : i32, i32, i32
  }
  func.func @transform_3(%arg0: i32, %arg1: i32) -> (i32, i32) {
    %c0_i32 = arith.constant 0 : i32
    return %arg0, %arg1 : i32, i32
  }
  func.func @transform_4(%arg0: i32, %arg1: i32) -> (i32, i32) {
    %c0_i32 = arith.constant 0 : i32
    return %arg0, %arg1 : i32, i32
  }
}

</mosaic_0001>

<llo_original>
// kernel: tpu_custom_call.1
$region0: #{tpu_custom_call.1}
  #allocation0 [shape = 'u32[]', space=smem, size = 0x4, offset = 0x4, fixed_abs, tag = 'smem constant byte address 0x4 - core index']
  #allocation1 [shape = 'u32[144,128]{1,0:T(1,128)}', space=vmem, size = 0x12000, scoped, tag = 'internal scratch']
  %s0 = inlined_call_operand.hbm [shape: f32[4,128], index: 0, kind: input, shape index: {}]
  %s1 = inlined_call_operand.hbm [shape: f32[2,4,2,128], index: 1, kind: input, shape index: {}]
  %s2 = inlined_call_operand.vmem [shape: s32[2,2,128], index: 2, kind: input, shape index: {}]
  %s3 = inlined_call_operand.hbm [shape: f32[16,128], index: 3, kind: output, shape index: {0}]
  %s4 = inlined_call_operand.hbm [shape: f32[16,128], index: 4, kind: output, shape index: {1}]
  %5 = xla_tuple %s3, %s4
  %s6 = sld [smem:[#allocation0]]
  $region61: #{tpu_custom_call.1} parent=0
    _
  %s8 = ssub.s32 1, %s6
  %s9 = scalar_select 0, %s8, %s6
  $region1: #{tpu_custom_call.1} parent=0
    #allocation2 [shape = 'u8[2048]{0}', space=vmem, size = 0x800, scoped, tag = 'input window, operand 0, single buffered']
    #allocation3 [shape = 's32[2]{0}', space=sflag, size = 0x8, scoped, tag = 'scoped memory for tpu_custom_call.1']
    #allocation4 [shape = 's32[2]{0}', space=sflag, size = 0x8, scoped, tag = 'scoped memory for tpu_custom_call.1']
    #allocation5 [shape = 'u8[8192]{0}', space=vmem, size = 0x2000, scoped, tag = 'input window, operand 1']
    #allocation6 [shape = 's32[2]{0}', space=sflag, size = 0x8, scoped, tag = 'scoped memory for tpu_custom_call.1']
    #allocation7 [shape = 'u8[8192]{0}', space=vmem, size = 0x2000, scoped, tag = 'output window, operand 0']
    #allocation8 [shape = 'u8[8192]{0}', space=vmem, size = 0x2000, scoped, tag = 'output window, operand 1']
    #allocation9 [shape = 's32[2]{0}', space=sflag, size = 0x8, scoped, tag = 'scoped memory for tpu_custom_call.1']
    %10 = vsyncpa [#allocation3], 0
    %11 = vsyncpa [#allocation6], 0
    %s12 = scalar_lea.sflag [#allocation6], 1
    %13 = vsyncpa %s12, 0
    %14 = vsyncpa [#allocation4], 0
    %s15 = scalar_lea.sflag [#allocation4], 1
    %16 = vsyncpa %s15, 0
    %17 = vsyncpa [#allocation9], 0
    %s18 = scalar_lea.sflag [#allocation9], 1
    %19 = vsyncpa %s18, 0
    loop: start=0, step=1, limit=4
    $region2: #{tpu_custom_call.1} parent=1 // loop_pre_header
      _
    $region3: #{tpu_custom_call.1} parent=1 // loop_header
      %s21 = sphi 0, %s25
      %p22 = scmp.ge.s32.totalorder %s21, 4
      %s28 = sphi 0, %s40
      %s29 = sphi 0, %s36
      %s30 = sphi 0, %s28
      %s31 = sphi 0, %s29
      %s32 = sphi 0, %s30
      %s33 = sphi 0, %s31
      %s41 = sphi 0, %s41
      %s43 = sphi 0, %s41
      %s44 = sphi 0, %s43
      %s58 = sphi 0, %s44
      %s66 = sphi 0, %s68
      %s69 = sphi 0, %s66
      %s70 = sphi 0, %s69
      %s86 = sphi 0, %s70
      %s94 = sphi 0, %s96
      %s97 = sphi 0, %s94
      %s98 = sphi 0, %s97
      %s114 = sphi 0, %s98
      %s122 = sphi 0, %s124
      %s125 = sphi 0, %s122
      %s126 = sphi 0, %s125
      %s142 = sphi 0, %s126
      %s150 = sphi 0, %s152
      %s153 = sphi 0, %s150
      %s154 = sphi 0, %s153
      %s170 = sphi 0, %s154
    $region4: #{tpu_custom_call.1} parent=1 // loop_header_branch
      %24 = sbr.rel (%p22) target = $region8
    $region5: #{tpu_custom_call.1} parent=1 // loop_body
      %s26 = ssub.s32 %s21, 1
      %s27 = ssub.s32 %s21, 2
      %s34 = sadd.s32 1, %s29
      %p35 = scmp.ge.s32.totalorder %s34, 1
      %s36 = scalar_select %p35, 0, %s34
      %s37 = sadd.s32 1, %s28
      %s38 = scalar_select %p35, %s37, %s28
      %p39 = scmp.ge.s32.totalorder %s38, 2
      %s40 = scalar_select %p39, 0, %s38
      %s42 = sadd.s32 %s41, 1
      %p45 = scmp.eq.s32.totalorder %s21, 1
      %p46 = scmp.ne.s32.totalorder %s41, %s43
      %p47 = scmp.eq.s32.totalorder %s21, 0
      %p48 = por %p46, %p47
      %p49 = scmp.ne.s32.totalorder %s41, %s43
      %p50 = scmp.eq.s32.totalorder %s26, 1
      %p51 = por %p49, %p50
      %p52 = scmp.ne.s32.totalorder %s43, %s44
      %p53 = scmp.eq.s32.totalorder %s26, 0
      %p54 = por %p52, %p53
      %p55 = scmp.ne.s32.totalorder %s43, %s44
      %p56 = scmp.eq.s32.totalorder %s27, 1
      %p57 = por %p55, %p56
      %p59 = scmp.ne.s32.totalorder %s44, %s58
      %p60 = scmp.eq.s32.totalorder %s27, 0
      %p61 = por %p59, %p60
      %s62 = ssub.s32 %s28, %s40
      %s63 = ssub.s32 %s29, %s36
      %s64 = sor.u32 %s62, %s63
      %p65 = scmp.eq.s32.totalorder %s64, 0
      %s67 = sadd.s32 %s66, 1
      %s68 = scalar_select %p65, %s66, %s67
      %p71 = pneg %p65
      %p72 = scmp.eq.s32.totalorder %s21, 1
      %p73 = por %p71, %p72
      %p74 = scmp.ne.s32.totalorder %s66, %s69
      %p75 = scmp.eq.s32.totalorder %s21, 0
      %p76 = por %p74, %p75
      %p77 = scmp.ne.s32.totalorder %s66, %s69
      %p78 = scmp.eq.s32.totalorder %s26, 1
      %p79 = por %p77, %p78
      %p80 = scmp.ne.s32.totalorder %s69, %s70
      %p81 = scmp.eq.s32.totalorder %s26, 0
      %p82 = por %p80, %p81
      %p83 = scmp.ne.s32.totalorder %s69, %s70
      %p84 = scmp.eq.s32.totalorder %s27, 1
      %p85 = por %p83, %p84
      %p87 = scmp.ne.s32.totalorder %s70, %s86
      %p88 = scmp.eq.s32.totalorder %s27, 0
      %p89 = por %p87, %p88
      %s90 = ssub.s32 %s28, %s40
      %s91 = ssub.s32 %s29, %s36
      %s92 = sor.u32 %s90, %s91
      %p93 = scmp.eq.s32.totalorder %s92, 0
      %s95 = sadd.s32 %s94, 1
      %s96 = scalar_select %p93, %s94, %s95
      %p99 = pneg %p93
      %p100 = scmp.eq.s32.totalorder %s21, 1
      %p101 = por %p99, %p100
      %p102 = scmp.ne.s32.totalorder %s94, %s97
      %p103 = scmp.eq.s32.totalorder %s21, 0
      %p104 = por %p102, %p103
      %p105 = scmp.ne.s32.totalorder %s94, %s97
      %p106 = scmp.eq.s32.totalorder %s26, 1
      %p107 = por %p105, %p106
      %p108 = scmp.ne.s32.totalorder %s97, %s98
      %p109 = scmp.eq.s32.totalorder %s26, 0
      %p110 = por %p108, %p109
      %p111 = scmp.ne.s32.totalorder %s97, %s98
      %p112 = scmp.eq.s32.totalorder %s27, 1
      %p113 = por %p111, %p112
      %p115 = scmp.ne.s32.totalorder %s98, %s114
      %p116 = scmp.eq.s32.totalorder %s27, 0
      %p117 = por %p115, %p116
      %s118 = ssub.s32 %s28, %s40
      %s119 = ssub.s32 %s29, %s36
      %s120 = sor.u32 %s118, %s119
      %p121 = scmp.eq.s32.totalorder %s120, 0
      %s123 = sadd.s32 %s122, 1
      %s124 = scalar_select %p121, %s122, %s123
      %p127 = pneg %p121
      %p128 = scmp.eq.s32.totalorder %s21, 1
      %p129 = por %p127, %p128
      %p130 = scmp.ne.s32.totalorder %s122, %s125
      %p131 = scmp.eq.s32.totalorder %s21, 0
      %p132 = por %p130, %p131
      %p133 = scmp.ne.s32.totalorder %s122, %s125
      %p134 = scmp.eq.s32.totalorder %s26, 1
      %p135 = por %p133, %p134
      %p136 = scmp.ne.s32.totalorder %s125, %s126
      %p137 = scmp.eq.s32.totalorder %s26, 0
      %p138 = por %p136, %p137
      %p139 = scmp.ne.s32.totalorder %s125, %s126
      %p140 = scmp.eq.s32.totalorder %s27, 1
      %p141 = por %p139, %p140
      %p143 = scmp.ne.s32.totalorder %s126, %s142
      %p144 = scmp.eq.s32.totalorder %s27, 0
      %p145 = por %p143, %p144
      %s146 = ssub.s32 %s28, %s40
      %s147 = ssub.s32 %s29, %s36
      %s148 = sor.u32 %s146, %s147
      %p149 = scmp.eq.s32.totalorder %s148, 0
      %s151 = sadd.s32 %s150, 1
      %s152 = scalar_select %p149, %s150, %s151
      %p155 = pneg %p149
      %p156 = scmp.eq.s32.totalorder %s21, 1
      %p157 = por %p155, %p156
      %p158 = scmp.ne.s32.totalorder %s150, %s153
      %p159 = scmp.eq.s32.totalorder %s21, 0
      %p160 = por %p158, %p159
      %p161 = scmp.ne.s32.totalorder %s150, %s153
      %p162 = scmp.eq.s32.totalorder %s26, 1
      %p163 = por %p161, %p162
      %p164 = scmp.ne.s32.totalorder %s153, %s154
      %p165 = scmp.eq.s32.totalorder %s26, 0
      %p166 = por %p164, %p165
      %p167 = scmp.ne.s32.totalorder %s153, %s154
      %p168 = scmp.eq.s32.totalorder %s27, 1
      %p169 = por %p167, %p168
      %p171 = scmp.ne.s32.totalorder %s154, %s170
      %p172 = scmp.eq.s32.totalorder %s27, 0
      %p173 = por %p171, %p172
      %p174 = scmp.le.s32.totalorder 1, %s21
      %p175 = scmp.lt.s32.totalorder %s21, 3
      %p176 = pnand %p174, %p175
      %p177 = pneg %p176
      // Predicated region
      $region9: #{tpu_custom_call.1} parent=5 // pred_check
        _
      $region10: #{tpu_custom_call.1} parent=5 // pred_check_branch
        %179 = sbr.rel (%p176) target = $region12
      $region11: #{tpu_custom_call.1} parent=5 // pred_region
        %s180 = ssub.s32 %s21, 1
        // Predicated region
        $region13: #{tpu_custom_call.1} parent=11 // pred_check
          %p181 = pneg %p54
        $region14: #{tpu_custom_call.1} parent=11 // pred_check_branch
          %183 = sbr.rel (%p181) target = $region16
        $region15: #{tpu_custom_call.1} parent=11 // pred_region
          %s185 = ssub.s32 64, 64
          %186 = vsyncadd [#allocation3], %s185
          %s188 = sshll.u32 [#allocation2], 4
          %s189 = int_to_ptr.vmem [resolvable:$true] %s188
          %191 = dma.hbm_to_vmem [thread:$0]  %s0, 64, %s189, [#allocation3]
        $region16: #{tpu_custom_call.1} parent=11 // pred_fallthru
          _
      $region12: #{tpu_custom_call.1} parent=5 // pred_fallthru
        _
      %p192 = scmp.lt.s32.totalorder %s21, 2
      // Predicated region
      $region17: #{tpu_custom_call.1} parent=5 // pred_check
        %p193 = pneg %p192
      $region18: #{tpu_custom_call.1} parent=5 // pred_check_branch
        %195 = sbr.rel (%p193) target = $region20
      $region19: #{tpu_custom_call.1} parent=5 // pred_region
        // Predicated region
        $region21: #{tpu_custom_call.1} parent=19 // pred_check
          %p196 = pneg %p76
        $region22: #{tpu_custom_call.1} parent=19 // pred_check_branch
          %198 = sbr.rel (%p196) target = $region24
        $region23: #{tpu_custom_call.1} parent=19 // pred_region
          %s199 = sand.u32 %s66, 1
          %s200 = scalar_lea.sflag [#allocation6], %s199
          %s201 = sand.u32 %s66, 1
          %s202 = smul.addr %s201, 8
          %s203 = scalar_lea.vmem [#allocation5], %s202
          %s205 = ssub.s32 128, 128
          %206 = vsyncadd %s200, %s205
          %s207 = smul.addr %s28, 4
          %s208 = sadd.s32 %s29, %s207
          %s209 = smul.addr %s208, 32
          %s210 = scalar_lea.hbm %s1, %s209
          %s211 = sshll.u32 %s203, 4
          %s212 = int_to_ptr.vmem [resolvable:$true] %s211
          %217 = dma.hbm_to_vmem [thread:$0]  %s210, 128, %s212, %s200, 32, 32, 2
        $region24: #{tpu_custom_call.1} parent=19 // pred_fallthru
          _
        // Predicated region
        $region25: #{tpu_custom_call.1} parent=19 // pred_check
          %p218 = pneg %p104
        $region26: #{tpu_custom_call.1} parent=19 // pred_check_branch
          %220 = sbr.rel (%p218) target = $region28
        $region27: #{tpu_custom_call.1} parent=19 // pred_region
          %p221 = scmp.lt.s32.totalorder %s28, 1
          %s222 = scalar_select %p221, %s28, 1
          %p223 = scmp.lt.s32.totalorder %s29, 0
          %s224 = scalar_select %p223, %s29, 0
          %s225 = sadd.s32 %s224, %s222
          %s226 = smul.addr %s225, 2
          %s227 = scalar_lea.vmem %s2, %s226
        $region28: #{tpu_custom_call.1} parent=19 // pred_fallthru
          _
      $region20: #{tpu_custom_call.1} parent=5 // pred_fallthru
        _
      %p228 = scmp.le.s32.totalorder 1, %s21
      %p229 = scmp.lt.s32.totalorder %s21, 3
      %p230 = pnand %p228, %p229
      %p231 = pneg %p230
      // Predicated region
      $region29: #{tpu_custom_call.1} parent=5 // pred_check
        _
      $region30: #{tpu_custom_call.1} parent=5 // pred_check_branch
        %233 = sbr.rel (%p230) target = $region32
      $region31: #{tpu_custom_call.1} parent=5 // pred_region
        %s234 = ssub.s32 %s21, 1
        // Predicated region
        $region33: #{tpu_custom_call.1} parent=31 // pred_check
          %p235 = pneg %p54
        $region34: #{tpu_custom_call.1} parent=31 // pred_check_branch
          %237 = sbr.rel (%p235) target = $region36
        $region35: #{tpu_custom_call.1} parent=31 // pred_region
          %238 = dma.done [#allocation3], 64
        $region36: #{tpu_custom_call.1} parent=31 // pred_fallthru
          _
        %s239 = sand.u32 %s69, 1
        %s240 = scalar_lea.sflag [#allocation6], %s239
        %s241 = sand.u32 %s69, 1
        %s242 = smul.addr %s241, 8
        %s243 = scalar_lea.vmem [#allocation5], %s242
        // Predicated region
        $region37: #{tpu_custom_call.1} parent=31 // pred_check
          %p244 = pneg %p82
        $region38: #{tpu_custom_call.1} parent=31 // pred_check_branch
          %246 = sbr.rel (%p244) target = $region40
        $region39: #{tpu_custom_call.1} parent=31 // pred_region
          %247 = dma.done %s240, 128
        $region40: #{tpu_custom_call.1} parent=31 // pred_fallthru
          _
        %p248 = pneg %p54
        %p249 = pneg %p51
        %s250 = sand.u32 %s69, 1
        %s251 = scalar_lea.sflag [#allocation6], %s250
        %s252 = sand.u32 %s69, 1
        %s253 = smul.addr %s252, 8
        %s254 = scalar_lea.vmem [#allocation5], %s253
        %p255 = pneg %p82
        %p256 = pneg %p79
        %p257 = scmp.lt.s32.totalorder %s30, 1
        %s258 = scalar_select %p257, %s30, 1
        %p259 = scmp.lt.s32.totalorder %s31, 0
        %s260 = scalar_select %p259, %s31, 0
        %s261 = sadd.s32 %s260, %s258
        %s262 = smul.addr %s261, 2
        %s263 = scalar_lea.vmem %s2, %s262
        %p264 = pneg %p110
        %p265 = pneg %p107
        %p266 = pneg %p138
        %p267 = pneg %p135
        %s268 = sand.u32 %s125, 1
        %s269 = scalar_lea.sflag [#allocation4], %s268
        %s270 = sand.u32 %s125, 1
        %s271 = smul.addr %s270, 8
        %s272 = scalar_lea.vmem [#allocation7], %s271
        %p273 = pneg %p166
        %p274 = pneg %p163
        %s275 = sand.u32 %s153, 1
        %s276 = scalar_lea.sflag [#allocation9], %s275
        %s277 = sand.u32 %s153, 1
        %s278 = smul.addr %s277, 8
        %s279 = scalar_lea.vmem [#allocation8], %s278
        %p280 = scmp.lt.s32.totalorder %s30, 1
        %s281 = scalar_select %p280, %s30, 1
        %p282 = scmp.lt.s32.totalorder %s31, 0
        %s283 = scalar_select %p282, %s31, 0
        %s284 = sadd.s32 %s283, %s281
        %s285 = smul.addr %s284, 2
        %s286 = scalar_lea.vmem %s2, %s285
        %v287 = vld [vmem:[%s286] sm:$0x3]
        %v288 = vld [vmem:[#allocation2] sm:$0xf]
        %vm289 = vcmp.eq.s32.totalorder %v287, 0
        %v290 = vld [vmem:[%s243] sm:$0x3]
        %v291 = vsel %vm289, %v290, 0.0
        %v292 = vlaneseq
        %v293 = vshrl.u32 %v292, 7
        %v294 = vsub.s32 0, %v293
        %v295 = vrot.slane %v288, %v294
        %v296 = vmul.f32 %v291, %v295
        %vm297 = vcmask 1041408
        %v298 = vsel %vm297, %v296, 0.0
        %299 = vadd.xlane.f32.xlu0 %v298
        %v300 = vpop.xlane.xlu0 %299
        %v301 = vrot.slane %v300, 4
        %v302 = vadd.f32 %v300, %v301
        %v303 = vrot.slane %v302, 2
        %v304 = vadd.f32 %v302, %v303
        %v305 = vrot.slane %v304, 1
        %v306 = vadd.f32 %v304, %v305
        %s307 = vtos %v306
        %s308 = sadd.f32 %s307, 0.0
        %v309 = vsel %vm289, %v295, 0.0
        %v310 = vsel %vm297, %v309, 0.0
        %311 = vadd.xlane.f32.xlu0 %v310
        %v312 = vpop.xlane.xlu0 %311
        %v313 = vrot.slane %v312, 4
        %v314 = vadd.f32 %v312, %v313
        %v315 = vrot.slane %v314, 2
        %v316 = vadd.f32 %v314, %v315
        %v317 = vrot.slane %v316, 1
        %v318 = vadd.f32 %v316, %v317
        %s319 = vtos %v318
        %s320 = sadd.f32 %s319, 0.0
        %vm321 = vcmp.eq.s32.totalorder %v287, 1
        %s322 = scalar_lea.vmem %s243, 2 [#allocation5]
        %v323 = vld [vmem:[%s322] sm:$0x3]
        %v324 = vsel %vm321, %v323, 0.0
        %v325 = vlaneseq
        %v326 = vshrl.u32 %v325, 7
        %v327 = vsub.s32 1, %v326
        %v328 = vrot.slane %v288, %v327
        %v329 = vmul.f32 %v324, %v328
        %v330 = vsel %vm297, %v329, 0.0
        %331 = vadd.xlane.f32.xlu0 %v330
        %v332 = vpop.xlane.xlu0 %331
        %v333 = vrot.slane %v332, 4
        %v334 = vadd.f32 %v332, %v333
        %v335 = vrot.slane %v334, 2
        %v336 = vadd.f32 %v334, %v335
        %v337 = vrot.slane %v336, 1
        %v338 = vadd.f32 %v336, %v337
        %s339 = vtos %v338
        %s340 = sadd.f32 %s308, %s339
        %v341 = vsel %vm321, %v328, 0.0
        %v342 = vsel %vm297, %v341, 0.0
        %343 = vadd.xlane.f32.xlu0 %v342
        %v344 = vpop.xlane.xlu0 %343
        %v345 = vrot.slane %v344, 4
        %v346 = vadd.f32 %v344, %v345
        %v347 = vrot.slane %v346, 2
        %v348 = vadd.f32 %v346, %v347
        %v349 = vrot.slane %v348, 1
        %v350 = vadd.f32 %v348, %v349
        %s351 = vtos %v350
        %s352 = sadd.f32 %s320, %s351
        %vm353 = vcmp.eq.s32.totalorder %v287, 2
        %s354 = scalar_lea.vmem %s243, 4 [#allocation5]
        %v355 = vld [vmem:[%s354] sm:$0x3]
        %v356 = vsel %vm353, %v355, 0.0
        %v357 = vlaneseq
        %v358 = vshrl.u32 %v357, 7
        %v359 = vsub.s32 2, %v358
        %v360 = vrot.slane %v288, %v359
        %v361 = vmul.f32 %v356, %v360
        %v362 = vsel %vm297, %v361, 0.0
        %363 = vadd.xlane.f32.xlu0 %v362
        %v364 = vpop.xlane.xlu0 %363
        %v365 = vrot.slane %v364, 4
        %v366 = vadd.f32 %v364, %v365
        %v367 = vrot.slane %v366, 2
        %v368 = vadd.f32 %v366, %v367
        %v369 = vrot.slane %v368, 1
        %v370 = vadd.f32 %v368, %v369
        %s371 = vtos %v370
        %s372 = sadd.f32 %s340, %s371
        %v373 = vsel %vm353, %v360, 0.0
        %v374 = vsel %vm297, %v373, 0.0
        %375 = vadd.xlane.f32.xlu0 %v374
        %v376 = vpop.xlane.xlu0 %375
        %v377 = vrot.slane %v376, 4
        %v378 = vadd.f32 %v376, %v377
        %v379 = vrot.slane %v378, 2
        %v380 = vadd.f32 %v378, %v379
        %v381 = vrot.slane %v380, 1
        %v382 = vadd.f32 %v380, %v381
        %s383 = vtos %v382
        %s384 = sadd.f32 %s352, %s383
        %vm385 = vcmp.eq.s32.totalorder %v287, 3
        %s386 = scalar_lea.vmem %s243, 6 [#allocation5]
        %v387 = vld [vmem:[%s386] sm:$0x3]
        %v388 = vsel %vm385, %v387, 0.0
        %v389 = vlaneseq
        %v390 = vshrl.u32 %v389, 7
        %v391 = vsub.s32 3, %v390
        %v392 = vrot.slane %v288, %v391
        %v393 = vmul.f32 %v388, %v392
        %v394 = vsel %vm297, %v393, 0.0
        %395 = vadd.xlane.f32.xlu0 %v394
        %v396 = vpop.xlane.xlu0 %395
        %v397 = vrot.slane %v396, 4
        %v398 = vadd.f32 %v396, %v397
        %v399 = vrot.slane %v398, 2
        %v400 = vadd.f32 %v398, %v399
        %v401 = vrot.slane %v400, 1
        %v402 = vadd.f32 %v400, %v401
        %s403 = vtos %v402
        %s404 = sadd.f32 %s372, %s403
        %v405 = vsel %vm385, %v392, 0.0
        %v406 = vsel %vm297, %v405, 0.0
        %407 = vadd.xlane.f32.xlu0 %v406
        %v408 = vpop.xlane.xlu0 %407
        %v409 = vrot.slane %v408, 4
        %v410 = vadd.f32 %v408, %v409
        %v411 = vrot.slane %v410, 2
        %v412 = vadd.f32 %v410, %v411
        %v413 = vrot.slane %v412, 1
        %v414 = vadd.f32 %v412, %v413
        %s415 = vtos %v414
        %s416 = sadd.f32 %s384, %s415
        %v417 = vlaneseq
        %v418 = vshrl.u32 %v417, 7
        %v419 = vlaneseq
        %v420 = vand.u32 %v419, 127
        %vm421 = vcmp.eq.s32.totalorder %v418, 0
        %vm422 = vcmp.eq.s32.totalorder %v420, 0
        %vm423 = vmand %vm421, %vm422
        %v424 = vstv %s404
        %v425 = vsel %vm423, %v424, 0.0
        %426 = vst [vmem:[%s272] sm:$0xff] %v425
        %v427 = vstv %s416
        %v428 = vsel %vm423, %v427, 0.0
        %429 = vst [vmem:[%s279] sm:$0xff] %v428
        %s430 = sand.u32 %s125, 1
        %s431 = scalar_lea.sflag [#allocation4], %s430
        %s432 = sand.u32 %s125, 1
        %s433 = smul.addr %s432, 8
        %s434 = scalar_lea.vmem [#allocation7], %s433
        %s435 = sand.u32 %s153, 1
        %s436 = scalar_lea.sflag [#allocation9], %s435
        %s437 = sand.u32 %s153, 1
        %s438 = smul.addr %s437, 8
        %s439 = scalar_lea.vmem [#allocation8], %s438
        // Predicated region
        $region41: #{tpu_custom_call.1} parent=31 // pred_check
          %p440 = pneg %p135
        $region42: #{tpu_custom_call.1} parent=31 // pred_check_branch
          %442 = sbr.rel (%p440) target = $region44
        $region43: #{tpu_custom_call.1} parent=31 // pred_region
          %s444 = ssub.s32 128, 128
          %445 = vsyncadd %s431, %s444
          %s446 = sadd.s32 %s31, %s30
          %s447 = smul.addr %s446, 128
          %s448 = scalar_lea.hbm %s3, %s447
          %s450 = sshll.u32 %s434, 4
          %s451 = int_to_ptr.vmem [resolvable:$true] %s450
          %453 = dma.vmem_to_hbm [thread:$0]  %s451, 128, %s448, %s431
        $region44: #{tpu_custom_call.1} parent=31 // pred_fallthru
          _
        // Predicated region
        $region45: #{tpu_custom_call.1} parent=31 // pred_check
          %p454 = pneg %p163
        $region46: #{tpu_custom_call.1} parent=31 // pred_check_branch
          %456 = sbr.rel (%p454) target = $region48
        $region47: #{tpu_custom_call.1} parent=31 // pred_region
          %s458 = ssub.s32 128, 128
          %459 = vsyncadd %s436, %s458
          %s460 = sadd.s32 %s31, %s30
          %s461 = smul.addr %s460, 128
          %s462 = scalar_lea.hbm %s4, %s461
          %s464 = sshll.u32 %s439, 4
          %s465 = int_to_ptr.vmem [resolvable:$true] %s464
          %467 = dma.vmem_to_hbm [thread:$0]  %s465, 128, %s462, %s436
        $region48: #{tpu_custom_call.1} parent=31 // pred_fallthru
          _
      $region32: #{tpu_custom_call.1} parent=5 // pred_fallthru
        _
      %p468 = scmp.le.s32.totalorder 2, %s21
      // Predicated region
      $region49: #{tpu_custom_call.1} parent=5 // pred_check
        %p469 = pneg %p468
      $region50: #{tpu_custom_call.1} parent=5 // pred_check_branch
        %471 = sbr.rel (%p469) target = $region52
      $region51: #{tpu_custom_call.1} parent=5 // pred_region
        %s472 = ssub.s32 %s21, 2
        // Predicated region
        $region53: #{tpu_custom_call.1} parent=51 // pred_check
          %p473 = pneg %p141
        $region54: #{tpu_custom_call.1} parent=51 // pred_check_branch
          %475 = sbr.rel (%p473) target = $region56
        $region55: #{tpu_custom_call.1} parent=51 // pred_region
          %s476 = sand.u32 %s126, 1
          %s477 = scalar_lea.sflag [#allocation4], %s476
          %s478 = sand.u32 %s126, 1
          %s479 = smul.addr %s478, 8
          %s480 = scalar_lea.vmem [#allocation7], %s479
          %481 = dma.done %s477, 128
        $region56: #{tpu_custom_call.1} parent=51 // pred_fallthru
          _
        // Predicated region
        $region57: #{tpu_custom_call.1} parent=51 // pred_check
          %p482 = pneg %p169
        $region58: #{tpu_custom_call.1} parent=51 // pred_check_branch
          %484 = sbr.rel (%p482) target = $region60
        $region59: #{tpu_custom_call.1} parent=51 // pred_region
          %s485 = sand.u32 %s154, 1
          %s486 = scalar_lea.sflag [#allocation9], %s485
          %s487 = sand.u32 %s154, 1
          %s488 = smul.addr %s487, 8
          %s489 = scalar_lea.vmem [#allocation8], %s488
          %490 = dma.done %s486, 128
        $region60: #{tpu_custom_call.1} parent=51 // pred_fallthru
          _
      $region52: #{tpu_custom_call.1} parent=5 // pred_fallthru
        _
    $region6: #{tpu_custom_call.1} parent=1 // loop_footer
      %s25 = sadd.s32 1, %s21
    $region7: #{tpu_custom_call.1} parent=1 // loop_footer_branch
      %20 = sbr.rel target = $region3
    $region8: #{tpu_custom_call.1} parent=1 // loop_exit
      _
    %491 = vsyncpa [#allocation3], 1
    %s492 = scalar_lea.sflag [#allocation3], 1
    %493 = vsyncpa %s492, 1
    %494 = vsyncpa [#allocation6], 1
    %s495 = scalar_lea.sflag [#allocation6], 1
    %496 = vsyncpa %s495, 1
    %497 = vsyncpa [#allocation4], 1
    %s498 = scalar_lea.sflag [#allocation4], 1
    %499 = vsyncpa %s498, 1
    %500 = vsyncpa [#allocation9], 1
    %s501 = scalar_lea.sflag [#allocation9], 1
    %502 = vsyncpa %s501, 1

</llo_original>
